<compile_context>
chip_gen: v6e
topology: v6e:2x2x1
jax: 0.10.0
libtpu: 0.0.40
codegen_flags: <defaults>
</compile_context>

<pallas_src>
import functools

import jax
import jax.numpy as jnp
from jax.experimental import pallas as pl
from jax.experimental.pallas import tpu as pltpu


def stacked_lstm_kernel(x_ref, h0_ref, c0_ref, w_ih0_ref, w_hh_ref, b_ref,
                        *rest, num_layers, hidden):
    """One grid step = one LSTM time step over all layers (grid=(T,)).

    x_ref     : [1, B, D0]       input for this time step (layer 0)
    h0_ref    : [L, B, H]  f32   initial hidden state (aliased with h_out_ref)
    c0_ref    : [L, B, H]  f32   initial cell state   (aliased with c_out_ref)
    w_ih0_ref : [D0, 4H]   bf16  W_ih^T of layer 0, gate-permuted (i, f, o, g)
    w_hh_ref  : [L, H, 4H] bf16  W_hh^T per layer, gate-permuted
    b_ref     : [L, B, 4H] f32   (b_ih + b_hh), gate-permuted, batch-broadcast
    rest      : ([L-1, H, 4H] bf16 W_ih^T of layers 1..L-1  -- only if L > 1,)
                then h_out_ref, c_out_ref : [L, B, H] f32
    """
    if num_layers > 1:
        w_ih_rest_ref, h_out_ref, c_out_ref = rest
    else:
        w_ih_rest_ref = None
        h_out_ref, c_out_ref = rest

    H = hidden
    t = pl.program_id(0)

    # Load the initial state into the resident output buffers on the first step.
    # Afterwards the state lives in VMEM across grid steps (HBM writeback of the
    # constant-index output block only happens after the last step).
    @pl.when(t == 0)
    def _init():
        h_out_ref[...] = h0_ref[...].astype(h_out_ref.dtype)
        c_out_ref[...] = c0_ref[...].astype(c_out_ref.dtype)

    x = x_ref[0]                                      # [B, D0], layer-0 input

    for l in range(num_layers):                       # static unroll; L is small
        h_prev = h_out_ref[l]                         # [B, H] f32 (read BEFORE write)
        c_prev = c_out_ref[l]                         # [B, H] f32

        # Two bf16 MXU pushes with f32 accumulation; no unaligned lane concat.
        w_ih = w_ih0_ref[...] if l == 0 else w_ih_rest_ref[l - 1]
        gx = jnp.dot(x.astype(jnp.bfloat16), w_ih,
                     preferred_element_type=jnp.float32)
        gh = jnp.dot(h_prev.astype(jnp.bfloat16), w_hh_ref[l],
                     preferred_element_type=jnp.float32)
        gates = gx + gh + b_ref[l]                    # [B, 4H] f32

        # Gate order (packed): (i, f, o, g) -> one sigmoid pass + one tanh pass.
        s = jax.nn.sigmoid(gates[:, :3 * H])
        i_g = s[:, 0 * H:1 * H]
        f_g = s[:, 1 * H:2 * H]
        o_g = s[:, 2 * H:3 * H]
        g_g = jnp.tanh(gates[:, 3 * H:])

        c_new = f_g * c_prev + i_g * g_g
        h_new = o_g * jnp.tanh(c_new)

        h_out_ref[l] = h_new
        c_out_ref[l] = c_new

        # Inter-layer nn.Dropout is the identity in eval mode / p == 0.0.
        # TODO(synk): training-mode inter-layer dropout mask not implemented.
        x = h_new


def pack_stacked_lstm_params(params, *, num_layers, rnn_size, batch):
    """One-time repack of per-layer nn.LSTMCell weights (hoisted off the step path).

    * transposes W to [K, 4H] (matmul-ready),
    * permutes 4H gate columns from PyTorch (i, f, g, o) to (i, f, o, g),
    * stores the weights in bf16 (MXU-native; halves weight DMA / VMEM),
    * combines, permutes and pre-broadcasts the biases to [L, batch, 4H] f32.
    """
    H = rnn_size
    L = num_layers
    perm = jnp.concatenate([jnp.arange(0, 2 * H),          # i, f
                            jnp.arange(3 * H, 4 * H),      # o
                            jnp.arange(2 * H, 3 * H)])     # g

    def pack_w(w):                         # [4H, K] -> [K, 4H], permuted, bf16
        return w.T[:, perm].astype(jnp.bfloat16)

    packed = {
        "w_ih0": pack_w(params["w_ih"][0]),
        "w_hh": jnp.stack([pack_w(params["w_hh"][l]) for l in range(L)]),
        "b": jnp.stack([
            jnp.broadcast_to(
                (params["b_ih"][l] + params["b_hh"][l])[perm][None, :],
                (batch, 4 * H))
            for l in range(L)]).astype(jnp.float32),
    }
    if L > 1:
        packed["w_ih_rest"] = jnp.stack(
            [pack_w(params["w_ih"][l]) for l in range(1, L)])
    return packed


def _stacked_lstm_pallas(x_seq, h0, c0, packed, *, num_layers, rnn_size):
    """Fused sequence driver: grid=(T,), weights resident, state carried in VMEM."""
    T, B, D0 = x_seq.shape
    H = rnn_size
    L = num_layers

    kernel = functools.partial(stacked_lstm_kernel, num_layers=L, hidden=H)
    resident3 = lambda t: (0, 0, 0)   # constant index_map => DMA once, stay in VMEM
    resident2 = lambda t: (0, 0)

    in_specs = [
        pl.BlockSpec((1, B, D0), lambda t: (t, 0, 0)),   # x_t streamed per step
        pl.BlockSpec((L, B, H), resident3),              # h_0
        pl.BlockSpec((L, B, H), resident3),              # c_0
        pl.BlockSpec((D0, 4 * H), resident2),            # W_ih^T layer 0 (bf16)
        pl.BlockSpec((L, H, 4 * H), resident3),          # W_hh^T all layers (bf16)
        pl.BlockSpec((L, B, 4 * H), resident3),          # bias (f32)
    ]
    # .astype is a no-op when the caller already provides f32 state (state must
    # be f32 for the aliased in-place update + f32 elementwise math on v5e).
    args = [x_seq, h0.astype(jnp.float32), c0.astype(jnp.float32),
            packed["w_ih0"], packed["w_hh"], packed["b"]]
    if L > 1:                                            # no dummy tensor for L == 1
        in_specs.append(pl.BlockSpec((L - 1, H, 4 * H), resident3))
        args.append(packed["w_ih_rest"])

    h_all, c_all = pl.pallas_call(
        kernel,
        grid=(T,),
        out_shape=(jax.ShapeDtypeStruct((L, B, H), jnp.float32),
                   jax.ShapeDtypeStruct((L, B, H), jnp.float32)),
        in_specs=in_specs,
        out_specs=(pl.BlockSpec((L, B, H), resident3),
                   pl.BlockSpec((L, B, H), resident3)),
        # In-place recurrent state: h_0 -> h_out, c_0 -> c_out.  Safe: the input
        # state is DMA'd once before step 0; the aliased HBM buffer is only
        # written back after the last grid step.
        input_output_aliases={1: 0, 2: 1},
        compiler_params=pltpu.CompilerParams(
            dimension_semantics=("arbitrary",)),         # time is a recurrence
    )(*args)
    return h_all, c_all


@functools.partial(jax.jit, static_argnames=("num_layers", "rnn_size"))
def stacked_lstm_cell(x, h_c, packed, *, num_layers, rnn_size):
    """Single-step forward matching StackedLSTMCell.forward (dropout = identity).

    Args:
      x:      [B, input_size]
      h_c:    [2, num_layers, B, rnn_size]   (h_c[0] = h_0, h_c[1] = c_0)
      packed: output of pack_stacked_lstm_params (packed once, reused every call)
    Returns:
      (last_h, last_c), (h_all, c_all)  matching the PyTorch module.
    """
    h_all, c_all = _stacked_lstm_pallas(x[None], h_c[0], h_c[1], packed,
                                        num_layers=num_layers, rnn_size=rnn_size)
    return (h_all[-1], c_all[-1]), (h_all, c_all)


@functools.partial(jax.jit, static_argnames=("num_layers", "rnn_size"))
def stacked_lstm_sequence(x_seq, h_c, packed, *, num_layers, rnn_size):
    """Drive the cell over a whole sequence with ONE pallas_call (grid=(T,)).

    Launch overhead and weight DMA are amortized over all T steps.  Returns the
    final (h_all, c_all) state, i.e. the state after the last time step.
    """
    return _stacked_lstm_pallas(x_seq, h_c[0], h_c[1], packed,
                                num_layers=num_layers, rnn_size=rnn_size)


def init_params(key, num_layers, input_size, rnn_size):
    """Deterministic init matching nn.LSTMCell shapes (uniform(-k, k), k=1/sqrt(H))."""
    H = rnn_size
    k = 1.0 / jnp.sqrt(jnp.float32(H))
    params = {"w_ih": [], "w_hh": [], "b_ih": [], "b_hh": []}
    in_size = input_size
    for _ in range(num_layers):
        key, k1, k2, k3, k4 = jax.random.split(key, 5)
        params["w_ih"].append(jax.random.uniform(k1, (4 * H, in_size),
                                                 jnp.float32, -k, k))
        params["w_hh"].append(jax.random.uniform(k2, (4 * H, H),
                                                 jnp.float32, -k, k))
        params["b_ih"].append(jax.random.uniform(k3, (4 * H,), jnp.float32, -k, k))
        params["b_hh"].append(jax.random.uniform(k4, (4 * H,), jnp.float32, -k, k))
        in_size = rnn_size
    return params


def _reference(x_seq, h_c, params, *, num_layers, rnn_size, emulate_bf16):
    """Pure-JAX reference (mirrors the PyTorch forward over a sequence).

    emulate_bf16=True reproduces the kernel's numerics (bf16 matmul operands,
    f32 accumulation and f32 elementwise) for a tight comparison.
    """
    H = rnn_size

    def mm(a, w):
        if emulate_bf16:
            return jnp.dot(a.astype(jnp.bfloat16), w.T.astype(jnp.bfloat16),
                           preferred_element_type=jnp.float32)
        return jnp.dot(a, w.T, preferred_element_type=jnp.float32)

    h = [h_c[0][l] for l in range(num_layers)]
    c = [h_c[1][l] for l in range(num_layers)]
    for t in range(x_seq.shape[0]):
        inp = x_seq[t]
        for l in range(num_layers):
            gates = (mm(inp, params["w_ih"][l]) + params["b_ih"][l]
                     + mm(h[l], params["w_hh"][l]) + params["b_hh"][l])
            i_g = jax.nn.sigmoid(gates[:, 0 * H:1 * H])
            f_g = jax.nn.sigmoid(gates[:, 1 * H:2 * H])
            g_g = jnp.tanh(gates[:, 2 * H:3 * H])
            o_g = jax.nn.sigmoid(gates[:, 3 * H:4 * H])
            c[l] = f_g * c[l] + i_g * g_g
            h[l] = o_g * jnp.tanh(c[l])
            inp = h[l]
    return jnp.stack(h), jnp.stack(c)


if __name__ == "__main__":
    num_layers = 2
    input_size = 48
    rnn_size = 32
    batch = 8
    seq_len = 8
    # dropout=0.0 (eval semantics): the inter-layer Dropout is the identity.

    key = jax.random.PRNGKey(0)
    key, kx, kh = jax.random.split(key, 3)
    x_seq = jax.random.normal(kx, (seq_len, batch, input_size), jnp.float32)
    h_c = jax.random.normal(kh, (2, num_layers, batch, rnn_size), jnp.float32)
    params = init_params(key, num_layers, input_size, rnn_size)

    # Pack once (hoisted off the per-step path); reuse for every call.
    packed = pack_stacked_lstm_params(params, num_layers=num_layers,
                                      rnn_size=rnn_size, batch=batch)
    packed = jax.tree_util.tree_map(jax.block_until_ready, packed)

    # --- single step: exactly the PyTorch module's forward --------------------
    (last_h, last_c), (h_all, c_all) = stacked_lstm_cell(
        x_seq[0], h_c, packed, num_layers=num_layers, rnn_size=rnn_size)
    jax.block_until_ready((last_h, last_c, h_all, c_all))

    h_ref1b, c_ref1b = _reference(x_seq[:1], h_c, params, num_layers=num_layers,
                                  rnn_size=rnn_size, emulate_bf16=True)
    h_ref1f, c_ref1f = _reference(x_seq[:1], h_c, params, num_layers=num_layers,
                                  rnn_size=rnn_size, emulate_bf16=False)
    assert h_all.shape == (num_layers, batch, rnn_size)
    assert c_all.shape == (num_layers, batch, rnn_size)
    assert last_h.shape == (batch, rnn_size)
    assert jnp.allclose(h_all, h_ref1b, atol=5e-3, rtol=5e-3)
    assert jnp.allclose(c_all, c_ref1b, atol=5e-3, rtol=5e-3)
    assert jnp.allclose(last_h, h_ref1b[-1], atol=5e-3, rtol=5e-3)
    assert jnp.allclose(last_c, c_ref1b[-1], atol=5e-3, rtol=5e-3)
    assert jnp.allclose(h_all, h_ref1f, atol=5e-2, rtol=5e-2)   # vs full-f32 math
    assert jnp.allclose(c_all, c_ref1f, atol=5e-2, rtol=5e-2)

    # --- full sequence: time loop fused into one pallas_call ------------------
    h_T, c_T = stacked_lstm_sequence(x_seq, h_c, packed,
                                     num_layers=num_layers, rnn_size=rnn_size)
    jax.block_until_ready((h_T, c_T))

    h_refTb, c_refTb = _reference(x_seq, h_c, params, num_layers=num_layers,
                                  rnn_size=rnn_size, emulate_bf16=True)
    h_refTf, c_refTf = _reference(x_seq, h_c, params, num_layers=num_layers,
                                  rnn_size=rnn_size, emulate_bf16=False)
    assert jnp.allclose(h_T, h_refTb, atol=1e-2, rtol=1e-2)
    assert jnp.allclose(c_T, c_refTb, atol=1e-2, rtol=1e-2)
    assert jnp.allclose(h_T, h_refTf, atol=5e-2, rtol=5e-2)
    assert jnp.allclose(c_T, c_refTf, atol=5e-2, rtol=5e-2)

    print("KERNEL_OK")
</pallas_src>

<mosaic_0001>
module attributes {stable_mosaic.version = 11 : i64} {
  func.func @stacked_lstm_kernel(%arg0: i32, %arg1: memref<1x8x48xf32, #tpu.memory_space<vmem>>, %arg2: memref<2x8x32xf32, #tpu.memory_space<vmem>>, %arg3: memref<2x8x32xf32, #tpu.memory_space<vmem>>, %arg4: memref<48x128xbf16, #tpu.memory_space<vmem>>, %arg5: memref<2x32x128xbf16, #tpu.memory_space<vmem>>, %arg6: memref<2x8x128xf32, #tpu.memory_space<vmem>>, %arg7: memref<1x32x128xbf16, #tpu.memory_space<vmem>>, %arg8: memref<2x8x32xf32, #tpu.memory_space<vmem>>, %arg9: memref<2x8x32xf32, #tpu.memory_space<vmem>>) attributes {dimension_semantics = [#tpu.dimension_semantics<arbitrary>], iteration_bounds = array<i64: 1>, scalar_prefetch = 0 : i64, scratch_operands = 0 : i64, tpu.core_type = #tpu.core_type<tc>, window_params = [{transform_indices = @transform_0, window_bounds = array<i64: 1, 8, 48>}, {pipeline_mode = #tpu.pipeline_mode<synchronous>, transform_indices = @transform_1, window_bounds = array<i64: 2, 8, 32>}, {pipeline_mode = #tpu.pipeline_mode<synchronous>, transform_indices = @transform_2, window_bounds = array<i64: 2, 8, 32>}, {pipeline_mode = #tpu.pipeline_mode<synchronous>, transform_indices = @transform_3, window_bounds = array<i64: 48, 128>}, {pipeline_mode = #tpu.pipeline_mode<synchronous>, transform_indices = @transform_4, window_bounds = array<i64: 2, 32, 128>}, {pipeline_mode = #tpu.pipeline_mode<synchronous>, transform_indices = @transform_5, window_bounds = array<i64: 2, 8, 128>}, {pipeline_mode = #tpu.pipeline_mode<synchronous>, transform_indices = @transform_6, window_bounds = array<i64: 1, 32, 128>}, {pipeline_mode = #tpu.pipeline_mode<synchronous>, transform_indices = @transform_7, window_bounds = array<i64: 2, 8, 32>}, {pipeline_mode = #tpu.pipeline_mode<synchronous>, transform_indices = @transform_8, window_bounds = array<i64: 2, 8, 32>}]} {
    %c0_i32 = arith.constant 0 : i32
    %0 = arith.cmpi eq, %arg0, %c0_i32 : i32
    %1 = arith.extui %0 : i1 to i32
    %c0_i32_0 = arith.constant 0 : i32
    %2 = arith.cmpi ne, %1, %c0_i32_0 : i32
    scf.if %2 {
      %c0_48 = arith.constant 0 : index
      %c0_49 = arith.constant 0 : index
      %c0_50 = arith.constant 0 : index
      %80 = vector.load %arg2[%c0_48, %c0_49, %c0_50] : memref<2x8x32xf32, #tpu.memory_space<vmem>>, vector<2x8x32xf32>
      %c0_51 = arith.constant 0 : index
      %c0_52 = arith.constant 0 : index
      %c0_53 = arith.constant 0 : index
      %81 = vector.load %arg8[%c0_51, %c0_52, %c0_53] : memref<2x8x32xf32, #tpu.memory_space<vmem>>, vector<2x8x32xf32>
      tpu.vector_store %arg8[%c0_51, %c0_52, %c0_53], %80 {strides = array<i32>} : memref<2x8x32xf32, #tpu.memory_space<vmem>>, vector<2x8x32xf32>,
      %c0_54 = arith.constant 0 : index
      %c0_55 = arith.constant 0 : index
      %c0_56 = arith.constant 0 : index
      %82 = vector.load %arg3[%c0_54, %c0_55, %c0_56] : memref<2x8x32xf32, #tpu.memory_space<vmem>>, vector<2x8x32xf32>
      %c0_57 = arith.constant 0 : index
      %c0_58 = arith.constant 0 : index
      %c0_59 = arith.constant 0 : index
      %83 = vector.load %arg9[%c0_57, %c0_58, %c0_59] : memref<2x8x32xf32, #tpu.memory_space<vmem>>, vector<2x8x32xf32>
      tpu.vector_store %arg9[%c0_57, %c0_58, %c0_59], %82 {strides = array<i32>} : memref<2x8x32xf32, #tpu.memory_space<vmem>>, vector<2x8x32xf32>,
    } else {
    }
    %c0 = arith.constant 0 : index
    %c0_1 = arith.constant 0 : index
    %c0_2 = arith.constant 0 : index
    %3 = vector.load %arg1[%c0, %c0_1, %c0_2] : memref<1x8x48xf32, #tpu.memory_space<vmem>>, vector<1x8x48xf32>
    %4 = vector.shape_cast %3 : vector<1x8x48xf32> to vector<8x48xf32>
    %c0_3 = arith.constant 0 : index
    %c0_4 = arith.constant 0 : index
    %c0_5 = arith.constant 0 : index
    %5 = vector.load %arg8[%c0_3, %c0_4, %c0_5] : memref<2x8x32xf32, #tpu.memory_space<vmem>>, vector<1x8x32xf32>
    %6 = vector.shape_cast %5 : vector<1x8x32xf32> to vector<8x32xf32>
    %c0_6 = arith.constant 0 : index
    %c0_7 = arith.constant 0 : index
    %c0_8 = arith.constant 0 : index
    %7 = vector.load %arg9[%c0_6, %c0_7, %c0_8] : memref<2x8x32xf32, #tpu.memory_space<vmem>>, vector<1x8x32xf32>
    %8 = vector.shape_cast %7 : vector<1x8x32xf32> to vector<8x32xf32>
    %c0_9 = arith.constant 0 : index
    %c0_10 = arith.constant 0 : index
    %9 = vector.load %arg4[%c0_9, %c0_10] : memref<48x128xbf16, #tpu.memory_space<vmem>>, vector<48x128xbf16>
    %10 = arith.truncf %4 : vector<8x48xf32> to vector<8x48xbf16>
    %cst = arith.constant dense<0.000000e+00> : vector<8x128xf32>
    %11 = tpu.matmul %10, %9, %cst {dimension_numbers = #tpu.dot_dimension_numbers<[1], [0], [0], [1], [0, 0, 1, 1], [], []>} : vector<8x48xbf16>, vector<48x128xbf16>, vector<8x128xf32> -> vector<8x128xf32>
    %12 = arith.truncf %6 : vector<8x32xf32> to vector<8x32xbf16>
    %c0_11 = arith.constant 0 : index
    %c0_12 = arith.constant 0 : index
    %c0_13 = arith.constant 0 : index
    %13 = vector.load %arg5[%c0_11, %c0_12, %c0_13] : memref<2x32x128xbf16, #tpu.memory_space<vmem>>, vector<1x32x128xbf16>
    %14 = vector.shape_cast %13 : vector<1x32x128xbf16> to vector<32x128xbf16>
    %cst_14 = arith.constant dense<0.000000e+00> : vector<8x128xf32>
    %15 = tpu.matmul %12, %14, %cst_14 {dimension_numbers = #tpu.dot_dimension_numbers<[1], [0], [0], [1], [0, 0, 1, 1], [], []>} : vector<8x32xbf16>, vector<32x128xbf16>, vector<8x128xf32> -> vector<8x128xf32>
    %16 = arith.addf %11, %15 : vector<8x128xf32>
    %c0_15 = arith.constant 0 : index
    %c0_16 = arith.constant 0 : index
    %c0_17 = arith.constant 0 : index
    %17 = vector.load %arg6[%c0_15, %c0_16, %c0_17] : memref<2x8x128xf32, #tpu.memory_space<vmem>>, vector<1x8x128xf32>
    %18 = vector.shape_cast %17 : vector<1x8x128xf32> to vector<8x128xf32>
    %19 = arith.addf %16, %18 : vector<8x128xf32>
    %20 = vector.extract_strided_slice %19 {offsets = [0, 0], sizes = [8, 96], strides = [1, 1]} : vector<8x128xf32> to vector<8x96xf32>
    %21 = arith.negf %20 : vector<8x96xf32>
    %22 = math.exp %21 : vector<8x96xf32>
    %cst_18 = arith.constant 1.000000e+00 : f32
    %23 = vector.broadcast %cst_18 : f32 to vector<8x96xf32>
    %24 = arith.addf %23, %22 : vector<8x96xf32>
    %25 = arith.divf %23, %24 : vector<8x96xf32>
    %26 = vector.extract_strided_slice %25 {offsets = [0, 0], sizes = [8, 32], strides = [1, 1]} : vector<8x96xf32> to vector<8x32xf32>
    %27 = vector.extract_strided_slice %25 {offsets = [0, 32], sizes = [8, 32], strides = [1, 1]} : vector<8x96xf32> to vector<8x32xf32>
    %28 = vector.extract_strided_slice %25 {offsets = [0, 64], sizes = [8, 32], strides = [1, 1]} : vector<8x96xf32> to vector<8x32xf32>
    %29 = vector.extract_strided_slice %19 {offsets = [0, 96], sizes = [8, 32], strides = [1, 1]} : vector<8x128xf32> to vector<8x32xf32>
    %30 = math.tanh %29 : vector<8x32xf32>
    %31 = arith.mulf %27, %8 : vector<8x32xf32>
    %32 = arith.mulf %26, %30 : vector<8x32xf32>
    %33 = arith.addf %31, %32 : vector<8x32xf32>
    %34 = math.tanh %33 : vector<8x32xf32>
    %35 = arith.mulf %28, %34 : vector<8x32xf32>
    %c0_19 = arith.constant 0 : index
    %c0_20 = arith.constant 0 : index
    %c0_21 = arith.constant 0 : index
    %36 = vector.load %arg8[%c0_19, %c0_20, %c0_21] : memref<2x8x32xf32, #tpu.memory_space<vmem>>, vector<1x8x32xf32>
    %37 = vector.shape_cast %36 : vector<1x8x32xf32> to vector<8x32xf32>
    %38 = vector.shape_cast %35 : vector<8x32xf32> to vector<1x8x32xf32>
    tpu.vector_store %arg8[%c0_19, %c0_20, %c0_21], %38 {strides = array<i32>} : memref<2x8x32xf32, #tpu.memory_space<vmem>>, vector<1x8x32xf32>,
    %c0_22 = arith.constant 0 : index
    %c0_23 = arith.constant 0 : index
    %c0_24 = arith.constant 0 : index
    %39 = vector.load %arg9[%c0_22, %c0_23, %c0_24] : memref<2x8x32xf32, #tpu.memory_space<vmem>>, vector<1x8x32xf32>
    %40 = vector.shape_cast %39 : vector<1x8x32xf32> to vector<8x32xf32>
    %41 = vector.shape_cast %33 : vector<8x32xf32> to vector<1x8x32xf32>
    tpu.vector_store %arg9[%c0_22, %c0_23, %c0_24], %41 {strides = array<i32>} : memref<2x8x32xf32, #tpu.memory_space<vmem>>, vector<1x8x32xf32>,
    %c1 = arith.constant 1 : index
    %c0_25 = arith.constant 0 : index
    %c0_26 = arith.constant 0 : index
    %42 = vector.load %arg8[%c1, %c0_25, %c0_26] : memref<2x8x32xf32, #tpu.memory_space<vmem>>, vector<1x8x32xf32>
    %43 = vector.shape_cast %42 : vector<1x8x32xf32> to vector<8x32xf32>
    %c1_27 = arith.constant 1 : index
    %c0_28 = arith.constant 0 : index
    %c0_29 = arith.constant 0 : index
    %44 = vector.load %arg9[%c1_27, %c0_28, %c0_29] : memref<2x8x32xf32, #tpu.memory_space<vmem>>, vector<1x8x32xf32>
    %45 = vector.shape_cast %44 : vector<1x8x32xf32> to vector<8x32xf32>
    %c0_30 = arith.constant 0 : index
    %c0_31 = arith.constant 0 : index
    %c0_32 = arith.constant 0 : index
    %46 = vector.load %arg7[%c0_30, %c0_31, %c0_32] : memref<1x32x128xbf16, #tpu.memory_space<vmem>>, vector<1x32x128xbf16>
    %47 = vector.shape_cast %46 : vector<1x32x128xbf16> to vector<32x128xbf16>
    %48 = arith.truncf %35 : vector<8x32xf32> to vector<8x32xbf16>
    %cst_33 = arith.constant dense<0.000000e+00> : vector<8x128xf32>
    %49 = tpu.matmul %48, %47, %cst_33 {dimension_numbers = #tpu.dot_dimension_numbers<[1], [0], [0], [1], [0, 0, 1, 1], [], []>} : vector<8x32xbf16>, vector<32x128xbf16>, vector<8x128xf32> -> vector<8x128xf32>
    %50 = arith.truncf %43 : vector<8x32xf32> to vector<8x32xbf16>
    %c1_34 = arith.constant 1 : index
    %c0_35 = arith.constant 0 : index
    %c0_36 = arith.constant 0 : index
    %51 = vector.load %arg5[%c1_34, %c0_35, %c0_36] : memref<2x32x128xbf16, #tpu.memory_space<vmem>>, vector<1x32x128xbf16>
    %52 = vector.shape_cast %51 : vector<1x32x128xbf16> to vector<32x128xbf16>
    %cst_37 = arith.constant dense<0.000000e+00> : vector<8x128xf32>
    %53 = tpu.matmul %50, %52, %cst_37 {dimension_numbers = #tpu.dot_dimension_numbers<[1], [0], [0], [1], [0, 0, 1, 1], [], []>} : vector<8x32xbf16>, vector<32x128xbf16>, vector<8x128xf32> -> vector<8x128xf32>
    %54 = arith.addf %49, %53 : vector<8x128xf32>
    %c1_38 = arith.constant 1 : index
    %c0_39 = arith.constant 0 : index
    %c0_40 = arith.constant 0 : index
    %55 = vector.load %arg6[%c1_38, %c0_39, %c0_40] : memref<2x8x128xf32, #tpu.memory_space<vmem>>, vector<1x8x128xf32>
    %56 = vector.shape_cast %55 : vector<1x8x128xf32> to vector<8x128xf32>
    %57 = arith.addf %54, %56 : vector<8x128xf32>
    %58 = vector.extract_strided_slice %57 {offsets = [0, 0], sizes = [8, 96], strides = [1, 1]} : vector<8x128xf32> to vector<8x96xf32>
    %59 = arith.negf %58 : vector<8x96xf32>
    %60 = math.exp %59 : vector<8x96xf32>
    %cst_41 = arith.constant 1.000000e+00 : f32
    %61 = vector.broadcast %cst_41 : f32 to vector<8x96xf32>
    %62 = arith.addf %61, %60 : vector<8x96xf32>
    %63 = arith.divf %61, %62 : vector<8x96xf32>
    %64 = vector.extract_strided_slice %63 {offsets = [0, 0], sizes = [8, 32], strides = [1, 1]} : vector<8x96xf32> to vector<8x32xf32>
    %65 = vector.extract_strided_slice %63 {offsets = [0, 32], sizes = [8, 32], strides = [1, 1]} : vector<8x96xf32> to vector<8x32xf32>
    %66 = vector.extract_strided_slice %63 {offsets = [0, 64], sizes = [8, 32], strides = [1, 1]} : vector<8x96xf32> to vector<8x32xf32>
    %67 = vector.extract_strided_slice %57 {offsets = [0, 96], sizes = [8, 32], strides = [1, 1]} : vector<8x128xf32> to vector<8x32xf32>
    %68 = math.tanh %67 : vector<8x32xf32>
    %69 = arith.mulf %65, %45 : vector<8x32xf32>
    %70 = arith.mulf %64, %68 : vector<8x32xf32>
    %71 = arith.addf %69, %70 : vector<8x32xf32>
    %72 = math.tanh %71 : vector<8x32xf32>
    %73 = arith.mulf %66, %72 : vector<8x32xf32>
    %c1_42 = arith.constant 1 : index
    %c0_43 = arith.constant 0 : index
    %c0_44 = arith.constant 0 : index
    %74 = vector.load %arg8[%c1_42, %c0_43, %c0_44] : memref<2x8x32xf32, #tpu.memory_space<vmem>>, vector<1x8x32xf32>
    %75 = vector.shape_cast %74 : vector<1x8x32xf32> to vector<8x32xf32>
    %76 = vector.shape_cast %73 : vector<8x32xf32> to vector<1x8x32xf32>
    tpu.vector_store %arg8[%c1_42, %c0_43, %c0_44], %76 {strides = array<i32>} : memref<2x8x32xf32, #tpu.memory_space<vmem>>, vector<1x8x32xf32>,
    %c1_45 = arith.constant 1 : index
    %c0_46 = arith.constant 0 : index
    %c0_47 = arith.constant 0 : index
    %77 = vector.load %arg9[%c1_45, %c0_46, %c0_47] : memref<2x8x32xf32, #tpu.memory_space<vmem>>, vector<1x8x32xf32>
    %78 = vector.shape_cast %77 : vector<1x8x32xf32> to vector<8x32xf32>
    %79 = vector.shape_cast %71 : vector<8x32xf32> to vector<1x8x32xf32>
    tpu.vector_store %arg9[%c1_45, %c0_46, %c0_47], %79 {strides = array<i32>} : memref<2x8x32xf32, #tpu.memory_space<vmem>>, vector<1x8x32xf32>,
    return
  }
  func.func @transform_0(%arg0: i32) -> (i32, i32, i32) {
    %c0_i32 = arith.constant 0 : i32
    %c0_i32_0 = arith.constant 0 : i32
    %c0_i32_1 = arith.constant 0 : i32
    return %arg0, %c0_i32, %c0_i32_0 : i32, i32, i32
  }
  func.func @transform_1(%arg0: i32) -> (i32, i32, i32) {
    %c0_i32 = arith.constant 0 : i32
    %c0_i32_0 = arith.constant 0 : i32
    %c0_i32_1 = arith.constant 0 : i32
    %c0_i32_2 = arith.constant 0 : i32
    return %c0_i32, %c0_i32_0, %c0_i32_1 : i32, i32, i32
  }
  func.func @transform_2(%arg0: i32) -> (i32, i32, i32) {
    %c0_i32 = arith.constant 0 : i32
    %c0_i32_0 = arith.constant 0 : i32
    %c0_i32_1 = arith.constant 0 : i32
    %c0_i32_2 = arith.constant 0 : i32
    return %c0_i32, %c0_i32_0, %c0_i32_1 : i32, i32, i32
  }
  func.func @transform_3(%arg0: i32) -> (i32, i32) {
    %c0_i32 = arith.constant 0 : i32
    %c0_i32_0 = arith.constant 0 : i32
    %c0_i32_1 = arith.constant 0 : i32
    return %c0_i32, %c0_i32_0 : i32, i32
  }
  func.func @transform_4(%arg0: i32) -> (i32, i32, i32) {
    %c0_i32 = arith.constant 0 : i32
    %c0_i32_0 = arith.constant 0 : i32
    %c0_i32_1 = arith.constant 0 : i32
    %c0_i32_2 = arith.constant 0 : i32
    return %c0_i32, %c0_i32_0, %c0_i32_1 : i32, i32, i32
  }
  func.func @transform_5(%arg0: i32) -> (i32, i32, i32) {
    %c0_i32 = arith.constant 0 : i32
    %c0_i32_0 = arith.constant 0 : i32
    %c0_i32_1 = arith.constant 0 : i32
    %c0_i32_2 = arith.constant 0 : i32
    return %c0_i32, %c0_i32_0, %c0_i32_1 : i32, i32, i32
  }
  func.func @transform_6(%arg0: i32) -> (i32, i32, i32) {
    %c0_i32 = arith.constant 0 : i32
    %c0_i32_0 = arith.constant 0 : i32
    %c0_i32_1 = arith.constant 0 : i32
    %c0_i32_2 = arith.constant 0 : i32
    return %c0_i32, %c0_i32_0, %c0_i32_1 : i32, i32, i32
  }
  func.func @transform_7(%arg0: i32) -> (i32, i32, i32) {
    %c0_i32 = arith.constant 0 : i32
    %c0_i32_0 = arith.constant 0 : i32
    %c0_i32_1 = arith.constant 0 : i32
    %c0_i32_2 = arith.constant 0 : i32
    return %c0_i32, %c0_i32_0, %c0_i32_1 : i32, i32, i32
  }
  func.func @transform_8(%arg0: i32) -> (i32, i32, i32) {
    %c0_i32 = arith.constant 0 : i32
    %c0_i32_0 = arith.constant 0 : i32
    %c0_i32_1 = arith.constant 0 : i32
    %c0_i32_2 = arith.constant 0 : i32
    return %c0_i32, %c0_i32_0, %c0_i32_1 : i32, i32, i32
  }
}

</mosaic_0001>

<llo_original>
// kernel: stacked_lstm_cell.1
$region0: #{stacked_lstm_cell.1}
  #allocation0 [shape = 'u32[]', space=smem, size = 0x4, offset = 0x4, fixed_abs, tag = 'smem constant byte address 0x4 - core index']
  #allocation1 [shape = 'u32[144,128]{1,0:T(1,128)}', space=vmem, size = 0x12000, scoped, tag = 'internal scratch']
  %s0 = inlined_call_operand.hbm [shape: f32[1,8,48], index: 0, kind: input, shape index: {}]
  %s1 = inlined_call_operand.vmem [shape: f32[2,8,32], index: 1, kind: input, shape index: {}, may-alias: {1,7}]
  %s2 = inlined_call_operand.vmem [shape: f32[2,8,32], index: 2, kind: input, shape index: {}, may-alias: {2,8}]
  %s3 = inlined_call_operand.vmem [shape: bf16[48,128], index: 3, kind: input, shape index: {}]
  %s4 = inlined_call_operand.vmem [shape: bf16[2,32,128], index: 4, kind: input, shape index: {}]
  %s5 = inlined_call_operand.vmem [shape: f32[2,8,128], index: 5, kind: input, shape index: {}]
  %s6 = inlined_call_operand.hbm [shape: bf16[1,32,128], index: 6, kind: input, shape index: {}]
  %s7 = inlined_call_operand.vmem [shape: f32[2,8,32], index: 7, kind: output, shape index: {0}, may-alias: {1,7}]
  %s8 = inlined_call_operand.vmem [shape: f32[2,8,32], index: 8, kind: output, shape index: {1}, may-alias: {2,8}]
  %9 = xla_tuple %s7, %s8
  %s10 = sld [smem:[#allocation0]]
  $region58: #{stacked_lstm_cell.1} parent=0
    _
  %s12 = ssub.s32 1, %s10
  %s13 = scalar_select 0, %s12, %s10
  $region1: #{stacked_lstm_cell.1} parent=0
    #allocation2 [shape = 'u8[4096]{0}', space=vmem, size = 0x1000, scoped, tag = 'input window, operand 0, single buffered']
    #allocation3 [shape = 's32[1]{0}', space=sflag, size = 0x4, scoped, tag = 'scoped memory for stacked_lstm_cell.1']
    #allocation4 [shape = 'u8[8192]{0}', space=vmem, size = 0x2000, scoped, tag = 'input window, operand 6, single buffered']
    #allocation5 [shape = 's32[1]{0}', space=sflag, size = 0x4, scoped, tag = 'scoped memory for stacked_lstm_cell.1']
    %14 = vsyncpa [#allocation3], 0
    %15 = vsyncpa [#allocation5], 0
    // Predicated region
    $region2: #{stacked_lstm_cell.1} parent=1 // pred_check
      _
    $region3: #{stacked_lstm_cell.1} parent=1 // pred_check_branch
      %17 = sbr.rel (0) target = $region5
    $region4: #{stacked_lstm_cell.1} parent=1 // pred_region
      %s19 = ssub.s32 128, 128
      %20 = vsyncadd [#allocation3], %s19
      %s22 = sshll.u32 [#allocation2], 4
      %s23 = int_to_ptr.vmem [resolvable:$true] %s22
      %25 = dma.hbm_to_vmem [thread:$0]  %s0, 128, %s23, [#allocation3]
    $region5: #{stacked_lstm_cell.1} parent=1 // pred_fallthru
      _
    // Predicated region
    $region6: #{stacked_lstm_cell.1} parent=1 // pred_check
      _
    $region7: #{stacked_lstm_cell.1} parent=1 // pred_check_branch
      %27 = sbr.rel (0) target = $region9
    $region8: #{stacked_lstm_cell.1} parent=1 // pred_region
      _
    $region9: #{stacked_lstm_cell.1} parent=1 // pred_fallthru
      _
    // Predicated region
    $region10: #{stacked_lstm_cell.1} parent=1 // pred_check
      _
    $region11: #{stacked_lstm_cell.1} parent=1 // pred_check_branch
      %29 = sbr.rel (0) target = $region13
    $region12: #{stacked_lstm_cell.1} parent=1 // pred_region
      _
    $region13: #{stacked_lstm_cell.1} parent=1 // pred_fallthru
      _
    // Predicated region
    $region14: #{stacked_lstm_cell.1} parent=1 // pred_check
      _
    $region15: #{stacked_lstm_cell.1} parent=1 // pred_check_branch
      %31 = sbr.rel (0) target = $region17
    $region16: #{stacked_lstm_cell.1} parent=1 // pred_region
      _
    $region17: #{stacked_lstm_cell.1} parent=1 // pred_fallthru
      _
    // Predicated region
    $region18: #{stacked_lstm_cell.1} parent=1 // pred_check
      _
    $region19: #{stacked_lstm_cell.1} parent=1 // pred_check_branch
      %33 = sbr.rel (0) target = $region21
    $region20: #{stacked_lstm_cell.1} parent=1 // pred_region
      _
    $region21: #{stacked_lstm_cell.1} parent=1 // pred_fallthru
      _
    // Predicated region
    $region22: #{stacked_lstm_cell.1} parent=1 // pred_check
      _
    $region23: #{stacked_lstm_cell.1} parent=1 // pred_check_branch
      %35 = sbr.rel (0) target = $region25
    $region24: #{stacked_lstm_cell.1} parent=1 // pred_region
      _
    $region25: #{stacked_lstm_cell.1} parent=1 // pred_fallthru
      _
    // Predicated region
    $region26: #{stacked_lstm_cell.1} parent=1 // pred_check
      _
    $region27: #{stacked_lstm_cell.1} parent=1 // pred_check_branch
      %37 = sbr.rel (0) target = $region29
    $region28: #{stacked_lstm_cell.1} parent=1 // pred_region
      %s39 = ssub.s32 256, 256
      %40 = vsyncadd [#allocation5], %s39
      %s41 = sshll.u32 [#allocation4], 4
      %s42 = int_to_ptr.vmem [resolvable:$true] %s41
      %47 = dma.hbm_to_vmem [thread:$0]  %s6, 256, %s42, [#allocation5], 64, 64, 4
    $region29: #{stacked_lstm_cell.1} parent=1 // pred_fallthru
      _
    // Predicated region
    $region30: #{stacked_lstm_cell.1} parent=1 // pred_check
      _
    $region31: #{stacked_lstm_cell.1} parent=1 // pred_check_branch
      %49 = sbr.rel (0) target = $region33
    $region32: #{stacked_lstm_cell.1} parent=1 // pred_region
      %50 = dma.done [#allocation3], 128
    $region33: #{stacked_lstm_cell.1} parent=1 // pred_fallthru
      _
    // Predicated region
    $region34: #{stacked_lstm_cell.1} parent=1 // pred_check
      _
    $region35: #{stacked_lstm_cell.1} parent=1 // pred_check_branch
      %52 = sbr.rel (0) target = $region37
    $region36: #{stacked_lstm_cell.1} parent=1 // pred_region
      %53 = dma.done [#allocation5], 256
    $region37: #{stacked_lstm_cell.1} parent=1 // pred_fallthru
      _
    %p55 = scmp.eq.s32.totalorder 0, 0
    // Predicated region
    $region38: #{stacked_lstm_cell.1} parent=1 // pred_check
      %p56 = pneg %p55
    $region39: #{stacked_lstm_cell.1} parent=1 // pred_check_branch
      %58 = sbr.rel (%p56) target = $region41
    $region40: #{stacked_lstm_cell.1} parent=1 // pred_region
      %v59 = vld [vmem:[%s1] sm:$0xff]
      %v60 = vld [vmem:[%s1 + $0x8] sm:$0xff]
      %vm61 = vcmask 261120
      %62 = vst.msk [vmem:[%s7] sm:$0xff] %vm61, %v59
      %63 = vst.msk [vmem:[%s7 + $0x8] sm:$0xff] %vm61, %v60
      %v64 = vld [vmem:[%s2] sm:$0xff]
      %v65 = vld [vmem:[%s2 + $0x8] sm:$0xff]
      %66 = vst.msk [vmem:[%s8] sm:$0xff] %vm61, %v64
      %67 = vst.msk [vmem:[%s8 + $0x8] sm:$0xff] %vm61, %v65
    $region41: #{stacked_lstm_cell.1} parent=1 // pred_fallthru
      _
    %v68 = vld [vmem:[#allocation2] sm:$0xff]
    %v69 = vld [vmem:[%s7] sm:$0xff]
    %v70 = vld [vmem:[%s8] sm:$0xff]
    %v71 = vld [vmem:[%s3] sm:$0xf]
    %v72 = vld [vmem:[%s3 + $0x4] sm:$0xf]
    %v73 = vld [vmem:[%s3 + $0x8] sm:$0xf]
    %v74 = vld [vmem:[%s3 + $0xc] sm:$0xf]
    %v75 = vld [vmem:[%s3 + $0x10] sm:$0xf]
    %v76 = vld [vmem:[%s3 + $0x14] sm:$0xf]
    %v77 = vpack.c.bf16 %v68, %v68
    %v78 = vpack.c.bf16 %v69, %v69
    %v79 = vld [vmem:[%s4] sm:$0xf]
    %v80 = vld [vmem:[%s4 + $0x4] sm:$0xf]
    %v81 = vld [vmem:[%s4 + $0x8] sm:$0xf]
    %v82 = vld [vmem:[%s4 + $0xc] sm:$0xf]
    %v87 = vunpack.c.l.b16 %v79
    %v88 = vunpack.c.l.b16 %v80
    %v89 = vunpack.c.l.b16 %v81
    %v90 = vunpack.c.l.b16 %v82
    %v91 = vpack.c.b16 %v88, %v87
    %v92 = vpack.c.b16 %v90, %v89
    %vm95 = vcmask 261120
    %v97 = vsel %vm95, %v78, 0
    %99 = vmatprep.subr.bf16.mxu0 0
    %100 = vmatpush1.bf16.msra.mxu0 0
    %101 = vmatprep.subr.bf16.mxu0 0
    %102 = vmatpush1.bf16.msra.mxu0 0
    %103 = vmatprep.subr.bf16.mxu0 0
    %104 = vmatpush1.bf16.msra.mxu0 0
    %105 = vmatprep.subr.bf16.mxu0 0
    %106 = vmatpush1.bf16.msra.mxu0 0
    %107 = vmatprep.subr.bf16.mxu0 0
    %108 = vmatpush1.bf16.msra.mxu0 0
    %109 = vmatprep.subr.bf16.mxu0 0
    %110 = vmatpush1.bf16.msra.mxu0 0
    %111 = vmatprep.subr.bf16.mxu0 0
    %112 = vmatpush1.bf16.msra.mxu0 %v92
    %113 = vmatprep.subr.bf16.mxu0 0
    %114 = vmatpush1.bf16.msra.mxu0 %v91
    %115 = vmatprep.subr.bf16.mxu0 0
    %116 = vmatpush2.bf16.msra.mxu0 0
    %117 = vmatprep.subr.bf16.mxu0 0
    %118 = vmatpush2.bf16.msra.mxu0 0
    %119 = vmatprep.subr.bf16.mxu0 0
    %120 = vmatpush2.bf16.msra.mxu0 0
    %121 = vmatprep.subr.bf16.mxu0 0
    %122 = vmatpush2.bf16.msra.mxu0 0
    %123 = vmatprep.subr.bf16.mxu0 0
    %124 = vmatpush2.bf16.msra.mxu0 0
    %125 = vmatprep.subr.bf16.mxu0 0
    %126 = vmatpush2.bf16.msra.mxu0 0
    %127 = vmatprep.subr.bf16.mxu0 0
    %128 = vmatpush2.bf16.msra.mxu0 0
    %129 = vmatprep.subr.bf16.mxu0 0
    %130 = vmatpush2.bf16.msra.mxu0 0
    %131 = vmatprep.mubr.bf16.mxu0 0
    %132 = vmatmul.mubr.bf16.gmra.mxu0 %v97
    %v133 = vpop.f32.mrf.mxu0
    %v134 = vadd.f32 0.0, %v133
    %v135 = vpop.f32.mrf.mxu0
    %v136 = vpop.f32.mrf.mxu0
    %v137 = vpop.f32.mrf.mxu0
    %138 = vdwg.mxu0
    %v145 = vunpack.c.l.b16 %v71
    %v146 = vunpack.c.l.b16 %v72
    %v147 = vunpack.c.l.b16 %v73
    %v148 = vunpack.c.l.b16 %v74
    %v149 = vunpack.c.l.b16 %v75
    %v150 = vunpack.c.l.b16 %v76
    %v151 = vpack.c.b16 %v146, %v145
    %v152 = vpack.c.b16 %v148, %v147
    %v153 = vpack.c.b16 %v150, %v149
    %vm157 = vcmask 392192
    %v159 = vsel %vm157, %v77, 0
    %161 = vmatprep.subr.bf16.mxu0 0
    %162 = vmatpush1.bf16.msra.mxu0 0
    %163 = vmatprep.subr.bf16.mxu0 0
    %164 = vmatpush1.bf16.msra.mxu0 0
    %165 = vmatprep.subr.bf16.mxu0 0
    %166 = vmatpush1.bf16.msra.mxu0 0
    %167 = vmatprep.subr.bf16.mxu0 0
    %168 = vmatpush1.bf16.msra.mxu0 0
    %169 = vmatprep.subr.bf16.mxu0 0
    %170 = vmatpush1.bf16.msra.mxu0 0
    %171 = vmatprep.subr.bf16.mxu0 0
    %172 = vmatpush1.bf16.msra.mxu0 %v153
    %173 = vmatprep.subr.bf16.mxu0 0
    %174 = vmatpush1.bf16.msra.mxu0 %v152
    %175 = vmatprep.subr.bf16.mxu0 0
    %176 = vmatpush1.bf16.msra.mxu0 %v151
    %177 = vmatprep.subr.bf16.mxu0 0
    %178 = vmatpush2.bf16.msra.mxu0 0
    %179 = vmatprep.subr.bf16.mxu0 0
    %180 = vmatpush2.bf16.msra.mxu0 0
    %181 = vmatprep.subr.bf16.mxu0 0
    %182 = vmatpush2.bf16.msra.mxu0 0
    %183 = vmatprep.subr.bf16.mxu0 0
    %184 = vmatpush2.bf16.msra.mxu0 0
    %185 = vmatprep.subr.bf16.mxu0 0
    %186 = vmatpush2.bf16.msra.mxu0 0
    %187 = vmatprep.subr.bf16.mxu0 0
    %188 = vmatpush2.bf16.msra.mxu0 0
    %189 = vmatprep.subr.bf16.mxu0 0
    %190 = vmatpush2.bf16.msra.mxu0 0
    %191 = vmatprep.subr.bf16.mxu0 0
    %192 = vmatpush2.bf16.msra.mxu0 0
    %193 = vmatprep.mubr.bf16.mxu0 0
    %194 = vmatmul.mubr.bf16.gmra.mxu0 %v159
    %v195 = vpop.f32.mrf.mxu0
    %v196 = vadd.f32 %v134, %v195
    %v197 = vpop.f32.mrf.mxu0
    %v198 = vpop.f32.mrf.mxu0
    %v199 = vpop.f32.mrf.mxu0
    %200 = vdwg.mxu0
    %v201 = vld [vmem:[%s5] sm:$0xff]
    %v202 = vadd.f32 %v196, %v201
    %v203 = vxor.u32 %v202, 2147483648
    %v204 = vmul.f32 %v203, 1.442695
    %v205 = vpow.pop %v204
    %v206 = vadd.f32 %v205, 1.0
    %v207 = vrcp.pop %v206
    %v208 = vmul.f32 1.0, %v207
    %v209 = vtanh.pop %v202
    %211 = vrot.lane.b32.xlu0 %v70, 32
    %v212 = vpop.permute.xlu0 %211
    %v214 = vmul.f32 %v208, %v212
    %216 = vrot.lane.b32.xlu0 %v209, 32
    %v217 = vpop.permute.xlu0 %216
    %v219 = vmul.f32 %v208, %v217
    %221 = vrot.lane.b32.xlu0 %v219, 32
    %v222 = vpop.permute.xlu0 %221
    %v224 = vadd.f32 %v214, %v222
    %v225 = vtanh.pop %v224
    %227 = vrot.lane.b32.xlu0 %v225, 32
    %v228 = vpop.permute.xlu0 %227
    %v230 = vmul.f32 %v208, %v228
    %232 = vrot.lane.b32.xlu0 %v230, 64
    %v233 = vpop.permute.xlu0 %232
    %235 = vst.msk [vmem:[%s7] sm:$0xff] %vm95, %v233
    %237 = vrot.lane.b32.xlu0 %v224, 96
    %v238 = vpop.permute.xlu0 %237
    %240 = vst.msk [vmem:[%s8] sm:$0xff] %vm95, %v238
    %s241 = scalar_lea.vmem %s7, 8
    %v242 = vld [vmem:[%s241] sm:$0xff]
    %s243 = scalar_lea.vmem %s8, 8
    %v244 = vld [vmem:[%s243] sm:$0xff]
    %v245 = vld [vmem:[#allocation4] sm:$0xf]
    %v246 = vld [vmem:[#allocation4 + $0x4] sm:$0xf]
    %v247 = vld [vmem:[#allocation4 + $0x8] sm:$0xf]
    %v248 = vld [vmem:[#allocation4 + $0xc] sm:$0xf]
    %v249 = vpack.c.bf16 %v230, %v230
    %v250 = vpack.c.bf16 %v242, %v242
    %s251 = scalar_lea.vmem %s4, 16
    %v252 = vld [vmem:[%s251] sm:$0xf]
    %v253 = vld [vmem:[%s251 + $0x4] sm:$0xf]
    %v254 = vld [vmem:[%s251 + $0x8] sm:$0xf]
    %v255 = vld [vmem:[%s251 + $0xc] sm:$0xf]
    %v260 = vunpack.c.l.b16 %v252
    %v261 = vunpack.c.l.b16 %v253
    %v262 = vunpack.c.l.b16 %v254
    %v263 = vunpack.c.l.b16 %v255
    %v264 = vpack.c.b16 %v261, %v260
    %v265 = vpack.c.b16 %v263, %v262
    %v269 = vsel %vm95, %v250, 0
    %271 = vmatprep.subr.bf16.mxu0 0
    %272 = vmatpush1.bf16.msra.mxu0 0
    %273 = vmatprep.subr.bf16.mxu0 0
    %274 = vmatpush1.bf16.msra.mxu0 0
    %275 = vmatprep.subr.bf16.mxu0 0
    %276 = vmatpush1.bf16.msra.mxu0 0
    %277 = vmatprep.subr.bf16.mxu0 0
    %278 = vmatpush1.bf16.msra.mxu0 0
    %279 = vmatprep.subr.bf16.mxu0 0
    %280 = vmatpush1.bf16.msra.mxu0 0
    %281 = vmatprep.subr.bf16.mxu0 0
    %282 = vmatpush1.bf16.msra.mxu0 0
    %283 = vmatprep.subr.bf16.mxu0 0
    %284 = vmatpush1.bf16.msra.mxu0 %v265
    %285 = vmatprep.subr.bf16.mxu0 0
    %286 = vmatpush1.bf16.msra.mxu0 %v264
    %287 = vmatprep.subr.bf16.mxu0 0
    %288 = vmatpush2.bf16.msra.mxu0 0
    %289 = vmatprep.subr.bf16.mxu0 0
    %290 = vmatpush2.bf16.msra.mxu0 0
    %291 = vmatprep.subr.bf16.mxu0 0
    %292 = vmatpush2.bf16.msra.mxu0 0
    %293 = vmatprep.subr.bf16.mxu0 0
    %294 = vmatpush2.bf16.msra.mxu0 0
    %295 = vmatprep.subr.bf16.mxu0 0
    %296 = vmatpush2.bf16.msra.mxu0 0
    %297 = vmatprep.subr.bf16.mxu0 0
    %298 = vmatpush2.bf16.msra.mxu0 0
    %299 = vmatprep.subr.bf16.mxu0 0
    %300 = vmatpush2.bf16.msra.mxu0 0
    %301 = vmatprep.subr.bf16.mxu0 0
    %302 = vmatpush2.bf16.msra.mxu0 0
    %303 = vmatprep.mubr.bf16.mxu0 0
    %304 = vmatmul.mubr.bf16.gmra.mxu0 %v269
    %v305 = vpop.f32.mrf.mxu0
    %v306 = vadd.f32 0.0, %v305
    %v307 = vpop.f32.mrf.mxu0
    %v308 = vpop.f32.mrf.mxu0
    %v309 = vpop.f32.mrf.mxu0
    %310 = vdwg.mxu0
    %312 = vrot.lane.b32.xlu0 %v249, 64
    %v313 = vpop.permute.xlu0 %312
    %v318 = vunpack.c.l.b16 %v245
    %v319 = vunpack.c.l.b16 %v246
    %v320 = vunpack.c.l.b16 %v247
    %v321 = vunpack.c.l.b16 %v248
    %v322 = vpack.c.b16 %v319, %v318
    %v323 = vpack.c.b16 %v321, %v320
    %v327 = vsel %vm95, %v313, 0
    %329 = vmatprep.subr.bf16.mxu0 0
    %330 = vmatpush1.bf16.msra.mxu0 0
    %331 = vmatprep.subr.bf16.mxu0 0
    %332 = vmatpush1.bf16.msra.mxu0 0
    %333 = vmatprep.subr.bf16.mxu0 0
    %334 = vmatpush1.bf16.msra.mxu0 0
    %335 = vmatprep.subr.bf16.mxu0 0
    %336 = vmatpush1.bf16.msra.mxu0 0
    %337 = vmatprep.subr.bf16.mxu0 0
    %338 = vmatpush1.bf16.msra.mxu0 0
    %339 = vmatprep.subr.bf16.mxu0 0
    %340 = vmatpush1.bf16.msra.mxu0 0
    %341 = vmatprep.subr.bf16.mxu0 0
    %342 = vmatpush1.bf16.msra.mxu0 %v323
    %343 = vmatprep.subr.bf16.mxu0 0
    %344 = vmatpush1.bf16.msra.mxu0 %v322
    %345 = vmatprep.subr.bf16.mxu0 0
    %346 = vmatpush2.bf16.msra.mxu0 0
    %347 = vmatprep.subr.bf16.mxu0 0
    %348 = vmatpush2.bf16.msra.mxu0 0
    %349 = vmatprep.subr.bf16.mxu0 0
    %350 = vmatpush2.bf16.msra.mxu0 0
    %351 = vmatprep.subr.bf16.mxu0 0
    %352 = vmatpush2.bf16.msra.mxu0 0
    %353 = vmatprep.subr.bf16.mxu0 0
    %354 = vmatpush2.bf16.msra.mxu0 0
    %355 = vmatprep.subr.bf16.mxu0 0
    %356 = vmatpush2.bf16.msra.mxu0 0
    %357 = vmatprep.subr.bf16.mxu0 0
    %358 = vmatpush2.bf16.msra.mxu0 0
    %359 = vmatprep.subr.bf16.mxu0 0
    %360 = vmatpush2.bf16.msra.mxu0 0
    %361 = vmatprep.mubr.bf16.mxu0 0
    %362 = vmatmul.mubr.bf16.gmra.mxu0 %v327
    %v363 = vpop.f32.mrf.mxu0
    %v364 = vadd.f32 %v306, %v363
    %v365 = vpop.f32.mrf.mxu0
    %v366 = vpop.f32.mrf.mxu0
    %v367 = vpop.f32.mrf.mxu0
    %368 = vdwg.mxu0
    %s369 = scalar_lea.vmem %s5, 8
    %v370 = vld [vmem:[%s369] sm:$0xff]
    %v371 = vadd.f32 %v364, %v370
    %v372 = vxor.u32 %v371, 2147483648
    %v373 = vmul.f32 %v372, 1.442695
    %v374 = vpow.pop %v373
    %v375 = vadd.f32 %v374, 1.0
    %v376 = vrcp.pop %v375
    %v377 = vmul.f32 1.0, %v376
    %v378 = vtanh.pop %v371
    %380 = vrot.lane.b32.xlu0 %v244, 32
    %v381 = vpop.permute.xlu0 %380
    %v383 = vmul.f32 %v377, %v381
    %385 = vrot.lane.b32.xlu0 %v378, 32
    %v386 = vpop.permute.xlu0 %385
    %v388 = vmul.f32 %v377, %v386
    %390 = vrot.lane.b32.xlu0 %v388, 32
    %v391 = vpop.permute.xlu0 %390
    %v393 = vadd.f32 %v383, %v391
    %v394 = vtanh.pop %v393
    %396 = vrot.lane.b32.xlu0 %v394, 32
    %v397 = vpop.permute.xlu0 %396
    %v399 = vmul.f32 %v377, %v397
    %401 = vrot.lane.b32.xlu0 %v399, 64
    %v402 = vpop.permute.xlu0 %401
    %404 = vst.msk [vmem:[%s241] sm:$0xff] %vm95, %v402
    %406 = vrot.lane.b32.xlu0 %v393, 96
    %v407 = vpop.permute.xlu0 %406
    %409 = vst.msk [vmem:[%s243] sm:$0xff] %vm95, %v407
    // Predicated region
    $region42: #{stacked_lstm_cell.1} parent=1 // pred_check
      _
    $region43: #{stacked_lstm_cell.1} parent=1 // pred_check_branch
      %411 = sbr.rel (0) target = $region45
    $region44: #{stacked_lstm_cell.1} parent=1 // pred_region
      _
    $region45: #{stacked_lstm_cell.1} parent=1 // pred_fallthru
      _
    // Predicated region
    $region46: #{stacked_lstm_cell.1} parent=1 // pred_check
      _
    $region47: #{stacked_lstm_cell.1} parent=1 // pred_check_branch
      %413 = sbr.rel (0) target = $region49
    $region48: #{stacked_lstm_cell.1} parent=1 // pred_region
      _
    $region49: #{stacked_lstm_cell.1} parent=1 // pred_fallthru
      _
    // Predicated region
    $region50: #{stacked_lstm_cell.1} parent=1 // pred_check
      _
    $region51: #{stacked_lstm_cell.1} parent=1 // pred_check_branch
      %415 = sbr.rel (0) target = $region53
    $region52: #{stacked_lstm_cell.1} parent=1 // pred_region
      _
    $region53: #{stacked_lstm_cell.1} parent=1 // pred_fallthru
      _
    // Predicated region
    $region54: #{stacked_lstm_cell.1} parent=1 // pred_check
      _
    $region55: #{stacked_lstm_cell.1} parent=1 // pred_check_branch
      %417 = sbr.rel (0) target = $region57
    $region56: #{stacked_lstm_cell.1} parent=1 // pred_region
      _
    $region57: #{stacked_lstm_cell.1} parent=1 // pred_fallthru
      _
    %418 = vsyncpa [#allocation3], 1
    %419 = vsyncpa [#allocation5], 1

</llo_original>
